<compile_context>
chip_gen: v6e
topology: v6e:2x2x1
jax: 0.10.0
libtpu: 0.0.40
codegen_flags: <defaults>
</compile_context>

<pallas_src>
import functools

import jax
import jax.numpy as jnp
from jax import lax
from jax.experimental import pallas as pl
from jax.experimental.pallas import tpu as pltpu

LRELU = 0.2
BN_EPS = 1e-5
LANE = 128

_STATS_BLOCK_BYTES = 8 * 1024 * 1024     # pass-1 input block target (x2 double buffer)
_CONV_IN_BLOCK_BYTES = 2 * 1024 * 1024   # pass-2 input block target (x2 double buffer)
_VMEM_LIMIT = 48 * 1024 * 1024           # fits v7x 64 MiB physical VMEM; v5e/v6e have 128 MiB


def _round_up(x, m):
    return (x + m - 1) // m * m


def _pick_tile_h(h, wp, cp):
    """Output rows per pass-2 grid step (even, VMEM-budgeted)."""
    th = _CONV_IN_BLOCK_BYTES // (wp * cp * 4)
    th = int(min(max(th, 2), 256))
    th -= th % 2
    th = min(th, _round_up(h, 2))
    return max(th, 2)


def _pick_stats_rows(h_in, tile_h, wp, cp):
    """Rows per pass-1 grid step: largest multiple of tile_h dividing h_in in budget."""
    n_t = h_in // tile_h
    per_tile = tile_h * wp * cp * 4
    for cand in range(n_t, 0, -1):
        if n_t % cand == 0 and cand * per_tile <= _STATS_BLOCK_BYTES:
            return cand * tile_h
    return tile_h


# ---------------------------------------------------------------------------
# Pass 1: per-image, per-channel sum and sum-of-squares over (H, W).
# Grid (N, row_tiles); row_tiles is the reduction axis (innermost, "arbitrary"),
# N is "parallel" so v7x megacore splits images across its two TensorCores.
# Padded rows/cols/channels are exact zeros -> they do not perturb the sums.
# ---------------------------------------------------------------------------
def _stats_kernel(x_ref, sum_ref, sq_ref):
    @pl.when(pl.program_id(1) == 0)
    def _():
        sum_ref[...] = jnp.zeros_like(sum_ref)
        sq_ref[...] = jnp.zeros_like(sq_ref)

    x = x_ref[0].astype(jnp.float32)                      # (rows, Wp, Cp)
    sum_ref[...] += jnp.sum(x, axis=(0, 1)).reshape(1, 1, -1)
    sq_ref[...] += jnp.sum(x * x, axis=(0, 1)).reshape(1, 1, -1)


# ---------------------------------------------------------------------------
# Pass 2: normalize (x*scale + shift) -> LeakyReLU -> 3x3 conv.
# xa_ref: rows [i*tile_h, (i+1)*tile_h) of the zero-padded input,
# xb_ref: the 2 halo rows [(i+1)*tile_h, (i+1)*tile_h + 2).
# a3_ref: bf16 VMEM scratch ((tile_h+2)*wp, 3*cp) holding [left, center, right]
#         kw taps; the three kh matmul operands are aligned row windows of it.
# ---------------------------------------------------------------------------
def _apply_conv_kernel(xa_ref, xb_ref, scale_ref, shift_ref, w_ref, o_ref,
                       a3_ref, *, true_h, true_w, tile_h):
    i = pl.program_id(1)
    wp = xa_ref.shape[2]
    cp = xa_ref.shape[3]
    coutp = o_ref.shape[3]

    scale = scale_ref[0]                                  # (cp,)
    shift = shift_ref[0]
    col_padded = true_w < wp                              # static python bool

    def taps(x, row0):
        # x: (r, wp, cp) raw zero-padded input rows (f32); row0: first padded row.
        r = x.shape[0]
        a = x * scale + shift                             # BN folded to one FMA
        a = jnp.maximum(a, LRELU * a)                     # LeakyReLU(0.2), one VPU op
        # Rows/cols that are the conv's zero padding must stay zero (BN maps 0->shift).
        # Masks are (r, wp, 1) broadcast over lanes: one full-size select only.
        row = lax.broadcasted_iota(jnp.int32, (r, wp, 1), 0) + row0
        col = lax.broadcasted_iota(jnp.int32, (r, wp, 1), 1)
        valid = (row >= 1) & (row <= true_h)
        if col_padded:
            valid = valid & (col < true_w)
        a = jnp.where(valid, a, 0.0)

        a2 = a.reshape(r * wp, cp)                        # layout-preserving (wp % 16 == 0)
        n = r * wp
        # kw taps via XLU sublane rotates (jnp.roll semantics): left[f] = a2[f-1],
        # right[f] = a2[f+1].  The wrapped column only needs fixing when there is no
        # zero column padding to absorb it (true_w == wp).
        left = pltpu.roll(a2, 1, axis=0)
        right = pltpu.roll(a2, n - 1, axis=0)             # == roll by -1
        if not col_padded:
            col2 = col.reshape(n, 1)
            left = jnp.where(col2 == 0, 0.0, left)
            right = jnp.where(col2 == wp - 1, 0.0, right)
        bf = jnp.bfloat16
        return left.astype(bf), a2.astype(bf), right.astype(bf)

    n_a = tile_h * wp
    n_b = 2 * wp

    la, ca, ra = taps(xa_ref[0].astype(jnp.float32), i * tile_h)
    a3_ref[0:n_a, 0:cp] = la
    a3_ref[0:n_a, cp:2 * cp] = ca
    a3_ref[0:n_a, 2 * cp:3 * cp] = ra

    lb, cb, rb = taps(xb_ref[0].astype(jnp.float32), (i + 1) * tile_h)
    a3_ref[n_a:n_a + n_b, 0:cp] = lb
    a3_ref[n_a:n_a + n_b, cp:2 * cp] = cb
    a3_ref[n_a:n_a + n_b, 2 * cp:3 * cp] = rb

    # Three bf16 MXU matmuls (K = 3*cp), f32 accumulation kept as a value so the
    # compiler accumulates in the MXU result path (no VMEM scratch round trips).
    # Operands are sublane-aligned row windows (offsets 0, wp, 2*wp; wp % 16 == 0).
    acc = jnp.dot(a3_ref[0:n_a, :], w_ref[0],
                  preferred_element_type=jnp.float32)
    acc += jnp.dot(a3_ref[wp:wp + n_a, :], w_ref[1],
                   preferred_element_type=jnp.float32)
    acc += jnp.dot(a3_ref[2 * wp:2 * wp + n_a, :], w_ref[2],
                   preferred_element_type=jnp.float32)

    o_ref[...] = acc.reshape(1, tile_h, wp, coutp).astype(o_ref.dtype)


def basic_block_bn(x_nchw, w_oihw, gamma, beta, *, tile_h=None):
    """NCHW in / NCHW out (PyTorch convention). Training-mode BN (batch statistics)."""
    N, C, H, W = x_nchw.shape
    cout, cin, kh, kw = w_oihw.shape
    assert (kh, kw) == (3, 3)
    assert cin == C, "BN(channels) is applied before conv -> in_channels == channels"

    cp = _round_up(C, LANE)                 # lane-dense input channels
    coutp = _round_up(cout, LANE)           # lane-dense output channels
    wp = _round_up(W, 16)                   # keep bf16 packed-sublane offsets aligned
    if tile_h is None:
        tile_h = _pick_tile_h(H, wp, cp)
    assert tile_h % 2 == 0 and tile_h >= 2
    h_out = _round_up(H, tile_h)
    h_in = h_out + tile_h                   # 1 leading zero row + real rows + zeros
    n_h = h_out // tile_h

    # ---- prep (layout plumbing only): NCHW -> NHWC, pad C/W, pad H with the
    #      conv's leading zero row plus trailing zeros up to h_in.
    x = jnp.transpose(x_nchw, (0, 2, 3, 1))
    x_prep = jnp.pad(x, ((0, 0), (1, h_in - H - 1), (0, wp - W), (0, cp - C)))

    # ---- pass 1: BN batch statistics (single pass: sum and sum of squares) ----
    stats_rows = _pick_stats_rows(h_in, tile_h, wp, cp)
    sums, sumsq = pl.pallas_call(
        _stats_kernel,
        out_shape=(jax.ShapeDtypeStruct((N, 1, cp), jnp.float32),
                   jax.ShapeDtypeStruct((N, 1, cp), jnp.float32)),
        grid=(N, h_in // stats_rows),
        in_specs=[pl.BlockSpec((1, stats_rows, wp, cp), lambda n, i: (n, i, 0, 0))],
        out_specs=(pl.BlockSpec((1, 1, cp), lambda n, i: (n, 0, 0)),
                   pl.BlockSpec((1, 1, cp), lambda n, i: (n, 0, 0))),
        compiler_params=pltpu.CompilerParams(
            dimension_semantics=("parallel", "arbitrary"),
            vmem_limit_bytes=_VMEM_LIMIT),
    )(x_prep)

    cnt = jnp.float32(N * H * W)
    s = jnp.sum(sums, axis=0)[0]
    ss = jnp.sum(sumsq, axis=0)[0]
    mean = s / cnt
    var = jnp.maximum(ss / cnt - mean * mean, 0.0)          # biased variance
    inv_std = lax.rsqrt(var + BN_EPS)
    gamma_p = jnp.pad(gamma.astype(jnp.float32), (0, cp - C), constant_values=1.0)
    beta_p = jnp.pad(beta.astype(jnp.float32), (0, cp - C))
    scale = (gamma_p * inv_std).reshape(1, cp)
    shift = (beta_p - mean * gamma_p * inv_std).reshape(1, cp)

    # ---- conv weights: OIHW -> HWIO, pad channels, fold kw into the K axis, bf16 ----
    w_hwio = jnp.transpose(w_oihw, (2, 3, 1, 0)).astype(jnp.float32)  # (3,3,Cin,Cout)
    w_pad = jnp.pad(w_hwio, ((0, 0), (0, 0), (0, cp - C), (0, coutp - cout)))
    w3 = w_pad.reshape(3, 3 * cp, coutp).astype(jnp.bfloat16)  # K index = kw*cp + cin

    # ---- pass 2: fused BN apply + LeakyReLU + 3x3 conv ----
    kernel = functools.partial(_apply_conv_kernel,
                               true_h=H, true_w=W, tile_h=tile_h)
    out_p = pl.pallas_call(
        kernel,
        out_shape=jax.ShapeDtypeStruct((N, h_out, wp, coutp), x_nchw.dtype),
        grid=(N, n_h),
        in_specs=[
            # tile body rows [i*tile_h, (i+1)*tile_h)
            pl.BlockSpec((1, tile_h, wp, cp), lambda n, i: (n, i, 0, 0)),
            # 2-row halo [(i+1)*tile_h, (i+1)*tile_h + 2)
            pl.BlockSpec((1, 2, wp, cp),
                         lambda n, i: (n, (i + 1) * (tile_h // 2), 0, 0)),
            pl.BlockSpec((1, cp), lambda n, i: (0, 0)),                # scale
            pl.BlockSpec((1, cp), lambda n, i: (0, 0)),                # shift
            pl.BlockSpec((3, 3 * cp, coutp), lambda n, i: (0, 0, 0)),  # weights (resident)
        ],
        out_specs=pl.BlockSpec((1, tile_h, wp, coutp), lambda n, i: (n, i, 0, 0)),
        scratch_shapes=[pltpu.VMEM(((tile_h + 2) * wp, 3 * cp), jnp.bfloat16)],
        compiler_params=pltpu.CompilerParams(
            dimension_semantics=("parallel", "parallel"),
            vmem_limit_bytes=_VMEM_LIMIT),
    )(x_prep, x_prep, scale, shift, w3)

    out = out_p[:, :H, :W, :cout]
    return jnp.transpose(out, (0, 3, 1, 2))                  # -> NCHW


def reference_forward(x_nchw, w_oihw, gamma, beta):
    """Pure-JAX reference mirroring the PyTorch module (training-mode BN)."""
    mean = jnp.mean(x_nchw, axis=(0, 2, 3), keepdims=True)
    var = jnp.mean((x_nchw - mean) ** 2, axis=(0, 2, 3), keepdims=True)
    xn = (x_nchw - mean) / jnp.sqrt(var + BN_EPS)
    xn = xn * gamma.reshape(1, -1, 1, 1) + beta.reshape(1, -1, 1, 1)
    act = jnp.where(xn >= 0, xn, LRELU * xn)
    return lax.conv_general_dilated(
        act, w_oihw, window_strides=(1, 1), padding=((1, 1), (1, 1)),
        dimension_numbers=("NCHW", "OIHW", "NCHW"))


if __name__ == "__main__":
    # BN is applied before the conv, so in_channels must equal channels.
    N, C, H, W = 2, 4, 16, 16
    in_channels = channels = C

    key = jax.random.PRNGKey(0)
    kx, kw = jax.random.split(key)

    x = jax.random.normal(kx, (N, C, H, W), dtype=jnp.float32)

    # Conv2d default init: U(-1/sqrt(fan_in), 1/sqrt(fan_in))
    fan_in = in_channels * 3 * 3
    bound = 1.0 / (fan_in ** 0.5)
    w = jax.random.uniform(kw, (channels, in_channels, 3, 3),
                           dtype=jnp.float32, minval=-bound, maxval=bound)

    # BatchNorm2d default init
    gamma = jnp.ones((channels,), dtype=jnp.float32)
    beta = jnp.zeros((channels,), dtype=jnp.float32)

    out = jax.block_until_ready(basic_block_bn(x, w, gamma, beta))
    ref = jax.block_until_ready(reference_forward(x, w, gamma, beta))

    assert out.shape == (N, channels, H, W), out.shape
    # bf16 MXU path (f32 accumulation): tolerance loosened vs the pure-f32 reference.
    assert jnp.allclose(out, ref, rtol=2e-2, atol=2e-2), \
        float(jnp.max(jnp.abs(out - ref)))

    print("KERNEL_OK")
</pallas_src>

<mosaic_0001>
module attributes {stable_mosaic.version = 11 : i64} {
  func.func @_stats_kernel(%arg0: i32, %arg1: i32, %arg2: memref<1x32x16x128xf32, #tpu.memory_space<vmem>>, %arg3: memref<1x1x128xf32, #tpu.memory_space<vmem>>, %arg4: memref<1x1x128xf32, #tpu.memory_space<vmem>>) attributes {dimension_semantics = [#tpu.dimension_semantics<parallel>, #tpu.dimension_semantics<arbitrary>], iteration_bounds = array<i64: 2, 1>, scalar_prefetch = 0 : i64, scratch_operands = 0 : i64, tpu.core_type = #tpu.core_type<tc>, window_params = [{transform_indices = @transform_0, window_bounds = array<i64: 1, 32, 16, 128>}, {transform_indices = @transform_1, window_bounds = array<i64: 1, 1, 128>}, {transform_indices = @transform_2, window_bounds = array<i64: 1, 1, 128>}]} {
    %c0_i32 = arith.constant 0 : i32
    %0 = arith.cmpi eq, %arg1, %c0_i32 : i32
    %1 = arith.extui %0 : i1 to i32
    %c0_i32_0 = arith.constant 0 : i32
    %2 = arith.cmpi ne, %1, %c0_i32_0 : i32
    scf.if %2 {
      %cst_17 = arith.constant 0.000000e+00 : f32
      %16 = vector.broadcast %cst_17 : f32 to vector<1x1x128xf32>
      %c0_18 = arith.constant 0 : index
      %c0_19 = arith.constant 0 : index
      %c0_20 = arith.constant 0 : index
      %17 = vector.load %arg3[%c0_18, %c0_19, %c0_20] : memref<1x1x128xf32, #tpu.memory_space<vmem>>, vector<1x1x128xf32>
      tpu.vector_store %arg3[%c0_18, %c0_19, %c0_20], %16 {strides = array<i32>} : memref<1x1x128xf32, #tpu.memory_space<vmem>>, vector<1x1x128xf32>,
      %cst_21 = arith.constant 0.000000e+00 : f32
      %18 = vector.broadcast %cst_21 : f32 to vector<1x1x128xf32>
      %c0_22 = arith.constant 0 : index
      %c0_23 = arith.constant 0 : index
      %c0_24 = arith.constant 0 : index
      %19 = vector.load %arg4[%c0_22, %c0_23, %c0_24] : memref<1x1x128xf32, #tpu.memory_space<vmem>>, vector<1x1x128xf32>
      tpu.vector_store %arg4[%c0_22, %c0_23, %c0_24], %18 {strides = array<i32>} : memref<1x1x128xf32, #tpu.memory_space<vmem>>, vector<1x1x128xf32>,
    } else {
    }
    %c0 = arith.constant 0 : index
    %c0_1 = arith.constant 0 : index
    %c0_2 = arith.constant 0 : index
    %c0_3 = arith.constant 0 : index
    %3 = vector.load %arg2[%c0, %c0_1, %c0_2, %c0_3] : memref<1x32x16x128xf32, #tpu.memory_space<vmem>>, vector<1x32x16x128xf32>
    %4 = vector.shape_cast %3 : vector<1x32x16x128xf32> to vector<32x16x128xf32>
    %c0_4 = arith.constant 0 : index
    %c0_5 = arith.constant 0 : index
    %c0_6 = arith.constant 0 : index
    %5 = vector.load %arg3[%c0_4, %c0_5, %c0_6] : memref<1x1x128xf32, #tpu.memory_space<vmem>>, vector<1x1x128xf32>
    %cst = arith.constant dense<0.000000e+00> : vector<128xf32>
    %6 = vector.multi_reduction <add>, %4, %cst [0, 1] : vector<32x16x128xf32> to vector<128xf32>
    %7 = vector.shape_cast %6 : vector<128xf32> to vector<1x1x128xf32>
    %8 = arith.addf %5, %7 : vector<1x1x128xf32>
    %c0_7 = arith.constant 0 : index
    %c0_8 = arith.constant 0 : index
    %c0_9 = arith.constant 0 : index
    %9 = vector.load %arg3[%c0_7, %c0_8, %c0_9] : memref<1x1x128xf32, #tpu.memory_space<vmem>>, vector<1x1x128xf32>
    tpu.vector_store %arg3[%c0_7, %c0_8, %c0_9], %8 {strides = array<i32>} : memref<1x1x128xf32, #tpu.memory_space<vmem>>, vector<1x1x128xf32>,
    %c0_10 = arith.constant 0 : index
    %c0_11 = arith.constant 0 : index
    %c0_12 = arith.constant 0 : index
    %10 = vector.load %arg4[%c0_10, %c0_11, %c0_12] : memref<1x1x128xf32, #tpu.memory_space<vmem>>, vector<1x1x128xf32>
    %11 = arith.mulf %4, %4 : vector<32x16x128xf32>
    %cst_13 = arith.constant dense<0.000000e+00> : vector<128xf32>
    %12 = vector.multi_reduction <add>, %11, %cst_13 [0, 1] : vector<32x16x128xf32> to vector<128xf32>
    %13 = vector.shape_cast %12 : vector<128xf32> to vector<1x1x128xf32>
    %14 = arith.addf %10, %13 : vector<1x1x128xf32>
    %c0_14 = arith.constant 0 : index
    %c0_15 = arith.constant 0 : index
    %c0_16 = arith.constant 0 : index
    %15 = vector.load %arg4[%c0_14, %c0_15, %c0_16] : memref<1x1x128xf32, #tpu.memory_space<vmem>>, vector<1x1x128xf32>
    tpu.vector_store %arg4[%c0_14, %c0_15, %c0_16], %14 {strides = array<i32>} : memref<1x1x128xf32, #tpu.memory_space<vmem>>, vector<1x1x128xf32>,
    return
  }
  func.func @transform_0(%arg0: i32, %arg1: i32) -> (i32, i32, i32, i32) {
    %c0_i32 = arith.constant 0 : i32
    %c0_i32_0 = arith.constant 0 : i32
    %c0_i32_1 = arith.constant 0 : i32
    return %arg0, %arg1, %c0_i32, %c0_i32_0 : i32, i32, i32, i32
  }
  func.func @transform_1(%arg0: i32, %arg1: i32) -> (i32, i32, i32) {
    %c0_i32 = arith.constant 0 : i32
    %c0_i32_0 = arith.constant 0 : i32
    %c0_i32_1 = arith.constant 0 : i32
    return %arg0, %c0_i32, %c0_i32_0 : i32, i32, i32
  }
  func.func @transform_2(%arg0: i32, %arg1: i32) -> (i32, i32, i32) {
    %c0_i32 = arith.constant 0 : i32
    %c0_i32_0 = arith.constant 0 : i32
    %c0_i32_1 = arith.constant 0 : i32
    return %arg0, %c0_i32, %c0_i32_0 : i32, i32, i32
  }
}

</mosaic_0001>

<llo_original>
// kernel: tpu_custom_call.1
$region0: #{tpu_custom_call.1}
  #allocation0 [shape = 'u32[]', space=smem, size = 0x4, offset = 0x4, fixed_abs, tag = 'smem constant byte address 0x4 - core index']
  #allocation1 [shape = 'u32[144,128]{1,0:T(1,128)}', space=vmem, size = 0x12000, scoped, tag = 'internal scratch']
  %s0 = inlined_call_operand.hbm [shape: f32[2,32,16,128], index: 0, kind: input, shape index: {}]
  %s1 = inlined_call_operand.hbm [shape: f32[2,1,128], index: 1, kind: output, shape index: {0}]
  %s2 = inlined_call_operand.hbm [shape: f32[2,1,128], index: 2, kind: output, shape index: {1}]
  %3 = xla_tuple %s1, %s2
  %s4 = sld [smem:[#allocation0]]
  $region53: #{tpu_custom_call.1} parent=0
    _
  %s6 = ssub.s32 1, %s4
  %s7 = scalar_select 0, %s6, %s4
  $region1: #{tpu_custom_call.1} parent=0
    #allocation2 [shape = 'u8[524288]{0}', space=vmem, size = 0x80000, scoped, tag = 'input window, operand 0']
    #allocation3 [shape = 's32[2]{0}', space=sflag, size = 0x8, scoped, tag = 'scoped memory for tpu_custom_call.1']
    #allocation4 [shape = 's32[2]{0}', space=sflag, size = 0x8, scoped, tag = 'scoped memory for tpu_custom_call.1']
    #allocation5 [shape = 'u8[1024]{0}', space=vmem, size = 0x400, scoped, tag = 'output window, operand 0']
    #allocation6 [shape = 'u8[1024]{0}', space=vmem, size = 0x400, scoped, tag = 'output window, operand 1']
    #allocation7 [shape = 's32[2]{0}', space=sflag, size = 0x8, scoped, tag = 'scoped memory for tpu_custom_call.1']
    %8 = vsyncpa [#allocation3], 0
    %s9 = scalar_lea.sflag [#allocation3], 1
    %10 = vsyncpa %s9, 0
    %11 = vsyncpa [#allocation4], 0
    %s12 = scalar_lea.sflag [#allocation4], 1
    %13 = vsyncpa %s12, 0
    %14 = vsyncpa [#allocation7], 0
    %s15 = scalar_lea.sflag [#allocation7], 1
    %16 = vsyncpa %s15, 0
    loop: start=0, step=1, limit=4
    $region2: #{tpu_custom_call.1} parent=1 // loop_pre_header
      _
    $region3: #{tpu_custom_call.1} parent=1 // loop_header
      %s18 = sphi 0, %s22
      %p19 = scmp.ge.s32.totalorder %s18, 4
      %s25 = sphi 0, %s37
      %s26 = sphi 0, %s33
      %s27 = sphi 0, %s25
      %s28 = sphi 0, %s26
      %s29 = sphi 0, %s27
      %s30 = sphi 0, %s28
      %s42 = sphi 0, %s44
      %s45 = sphi 0, %s42
      %s46 = sphi 0, %s45
      %s62 = sphi 0, %s46
      %s68 = sphi 0, %s70
      %s71 = sphi 0, %s68
      %s72 = sphi 0, %s71
      %s88 = sphi 0, %s72
      %s94 = sphi 0, %s96
      %s97 = sphi 0, %s94
      %s98 = sphi 0, %s97
      %s114 = sphi 0, %s98
    $region4: #{tpu_custom_call.1} parent=1 // loop_header_branch
      %21 = sbr.rel (%p19) target = $region8
    $region5: #{tpu_custom_call.1} parent=1 // loop_body
      %s23 = ssub.s32 %s18, 1
      %s24 = ssub.s32 %s18, 2
      %s31 = sadd.s32 1, %s26
      %p32 = scmp.ge.s32.totalorder %s31, 1
      %s33 = scalar_select %p32, 0, %s31
      %s34 = sadd.s32 1, %s25
      %s35 = scalar_select %p32, %s34, %s25
      %p36 = scmp.ge.s32.totalorder %s35, 2
      %s37 = scalar_select %p36, 0, %s35
      %s38 = ssub.s32 %s25, %s37
      %s39 = ssub.s32 %s26, %s33
      %s40 = sor.u32 %s38, %s39
      %p41 = scmp.eq.s32.totalorder %s40, 0
      %s43 = sadd.s32 %s42, 1
      %s44 = scalar_select %p41, %s42, %s43
      %p47 = pneg %p41
      %p48 = scmp.eq.s32.totalorder %s18, 1
      %p49 = por %p47, %p48
      %p50 = scmp.ne.s32.totalorder %s42, %s45
      %p51 = scmp.eq.s32.totalorder %s18, 0
      %p52 = por %p50, %p51
      %p53 = scmp.ne.s32.totalorder %s42, %s45
      %p54 = scmp.eq.s32.totalorder %s23, 1
      %p55 = por %p53, %p54
      %p56 = scmp.ne.s32.totalorder %s45, %s46
      %p57 = scmp.eq.s32.totalorder %s23, 0
      %p58 = por %p56, %p57
      %p59 = scmp.ne.s32.totalorder %s45, %s46
      %p60 = scmp.eq.s32.totalorder %s24, 1
      %p61 = por %p59, %p60
      %p63 = scmp.ne.s32.totalorder %s46, %s62
      %p64 = scmp.eq.s32.totalorder %s24, 0
      %p65 = por %p63, %p64
      %s66 = ssub.s32 %s25, %s37
      %p67 = scmp.eq.s32.totalorder %s66, 0
      %s69 = sadd.s32 %s68, 1
      %s70 = scalar_select %p67, %s68, %s69
      %p73 = pneg %p67
      %p74 = scmp.eq.s32.totalorder %s18, 1
      %p75 = por %p73, %p74
      %p76 = scmp.ne.s32.totalorder %s68, %s71
      %p77 = scmp.eq.s32.totalorder %s18, 0
      %p78 = por %p76, %p77
      %p79 = scmp.ne.s32.totalorder %s68, %s71
      %p80 = scmp.eq.s32.totalorder %s23, 1
      %p81 = por %p79, %p80
      %p82 = scmp.ne.s32.totalorder %s71, %s72
      %p83 = scmp.eq.s32.totalorder %s23, 0
      %p84 = por %p82, %p83
      %p85 = scmp.ne.s32.totalorder %s71, %s72
      %p86 = scmp.eq.s32.totalorder %s24, 1
      %p87 = por %p85, %p86
      %p89 = scmp.ne.s32.totalorder %s72, %s88
      %p90 = scmp.eq.s32.totalorder %s24, 0
      %p91 = por %p89, %p90
      %s92 = ssub.s32 %s25, %s37
      %p93 = scmp.eq.s32.totalorder %s92, 0
      %s95 = sadd.s32 %s94, 1
      %s96 = scalar_select %p93, %s94, %s95
      %p99 = pneg %p93
      %p100 = scmp.eq.s32.totalorder %s18, 1
      %p101 = por %p99, %p100
      %p102 = scmp.ne.s32.totalorder %s94, %s97
      %p103 = scmp.eq.s32.totalorder %s18, 0
      %p104 = por %p102, %p103
      %p105 = scmp.ne.s32.totalorder %s94, %s97
      %p106 = scmp.eq.s32.totalorder %s23, 1
      %p107 = por %p105, %p106
      %p108 = scmp.ne.s32.totalorder %s97, %s98
      %p109 = scmp.eq.s32.totalorder %s23, 0
      %p110 = por %p108, %p109
      %p111 = scmp.ne.s32.totalorder %s97, %s98
      %p112 = scmp.eq.s32.totalorder %s24, 1
      %p113 = por %p111, %p112
      %p115 = scmp.ne.s32.totalorder %s98, %s114
      %p116 = scmp.eq.s32.totalorder %s24, 0
      %p117 = por %p115, %p116
      %p118 = scmp.le.s32.totalorder 1, %s18
      %p119 = scmp.lt.s32.totalorder %s18, 3
      %p120 = pnand %p118, %p119
      %p121 = pneg %p120
      // Predicated region
      $region9: #{tpu_custom_call.1} parent=5 // pred_check
        _
      $region10: #{tpu_custom_call.1} parent=5 // pred_check_branch
        %123 = sbr.rel (%p120) target = $region12
      $region11: #{tpu_custom_call.1} parent=5 // pred_region
        %s124 = ssub.s32 %s18, 1
      $region12: #{tpu_custom_call.1} parent=5 // pred_fallthru
        _
      %p125 = scmp.lt.s32.totalorder %s18, 2
      // Predicated region
      $region13: #{tpu_custom_call.1} parent=5 // pred_check
        %p126 = pneg %p125
      $region14: #{tpu_custom_call.1} parent=5 // pred_check_branch
        %128 = sbr.rel (%p126) target = $region16
      $region15: #{tpu_custom_call.1} parent=5 // pred_region
        // Predicated region
        $region17: #{tpu_custom_call.1} parent=15 // pred_check
          %p129 = pneg %p52
        $region18: #{tpu_custom_call.1} parent=15 // pred_check_branch
          %131 = sbr.rel (%p129) target = $region20
        $region19: #{tpu_custom_call.1} parent=15 // pred_region
          %s132 = sand.u32 %s42, 1
          %s133 = scalar_lea.sflag [#allocation3], %s132
          %s134 = sand.u32 %s42, 1
          %s135 = smul.addr %s134, 512
          %s136 = scalar_lea.vmem [#allocation2], %s135
          %s137 = smul.u32 32, %s26
          %s139 = ssub.s32 8192, 8192
          %140 = vsyncadd %s133, %s139
          %s141 = smul.addr %s137, 2
          %s142 = smul.addr %s25, 64
          %s143 = sadd.s32 %s141, %s142
          %s144 = smul.addr %s143, 128
          %s145 = scalar_lea.hbm %s0, %s144
          %s146 = sshll.u32 %s136, 4
          %s147 = int_to_ptr.vmem [resolvable:$true] %s146
          %152 = dma.hbm_to_vmem [thread:$0]  %s145, 8192, %s147, %s133, 128, 128, 8
        $region20: #{tpu_custom_call.1} parent=15 // pred_fallthru
          _
      $region16: #{tpu_custom_call.1} parent=5 // pred_fallthru
        _
      %p153 = scmp.le.s32.totalorder 1, %s18
      %p154 = scmp.lt.s32.totalorder %s18, 3
      %p155 = pnand %p153, %p154
      %p156 = pneg %p155
      // Predicated region
      $region21: #{tpu_custom_call.1} parent=5 // pred_check
        _
      $region22: #{tpu_custom_call.1} parent=5 // pred_check_branch
        %158 = sbr.rel (%p155) target = $region24
      $region23: #{tpu_custom_call.1} parent=5 // pred_region
        %s159 = ssub.s32 %s18, 1
        %s160 = sand.u32 %s45, 1
        %s161 = scalar_lea.sflag [#allocation3], %s160
        %s162 = sand.u32 %s45, 1
        %s163 = smul.addr %s162, 512
        %s164 = scalar_lea.vmem [#allocation2], %s163
        // Predicated region
        $region25: #{tpu_custom_call.1} parent=23 // pred_check
          %p165 = pneg %p58
        $region26: #{tpu_custom_call.1} parent=23 // pred_check_branch
          %167 = sbr.rel (%p165) target = $region28
        $region27: #{tpu_custom_call.1} parent=23 // pred_region
          %168 = dma.done %s161, 8192
        $region28: #{tpu_custom_call.1} parent=23 // pred_fallthru
          _
        %s169 = sand.u32 %s45, 1
        %s170 = scalar_lea.sflag [#allocation3], %s169
        %s171 = sand.u32 %s45, 1
        %s172 = smul.addr %s171, 512
        %s173 = scalar_lea.vmem [#allocation2], %s172
        %p174 = pneg %p58
        %p175 = pneg %p55
        %p176 = pneg %p84
        %p177 = pneg %p81
        %s178 = sand.u32 %s71, 1
        %s179 = scalar_lea.sflag [#allocation4], %s178
        %s180 = sand.u32 %s71, 1
        %s181 = scalar_lea.vmem [#allocation5], %s180
        %p182 = pneg %p110
        %p183 = pneg %p107
        %s184 = sand.u32 %s97, 1
        %s185 = scalar_lea.sflag [#allocation7], %s184
        %s186 = sand.u32 %s97, 1
        %s187 = scalar_lea.vmem [#allocation6], %s186
        %s188 = smul.u32 32, %s28
        %p189 = scmp.eq.s32.totalorder %s28, 0
        // Predicated region
        $region29: #{tpu_custom_call.1} parent=23 // pred_check
          %p190 = pneg %p189
        $region30: #{tpu_custom_call.1} parent=23 // pred_check_branch
          %192 = sbr.rel (%p190) target = $region32
        $region31: #{tpu_custom_call.1} parent=23 // pred_region
          %193 = vst [vmem:[%s181] sm:$0x1] 0.0
          %194 = vst [vmem:[%s187] sm:$0x1] 0.0
        $region32: #{tpu_custom_call.1} parent=23 // pred_fallthru
          _
        %v195 = vld [vmem:[%s164] sm:$0xff]
        %v196 = vld [vmem:[%s164 + $0x8] sm:$0xff]
        %v197 = vld [vmem:[%s164 + $0x10] sm:$0xff]
        %v198 = vld [vmem:[%s164 + $0x18] sm:$0xff]
        %v199 = vld [vmem:[%s164 + $0x20] sm:$0xff]
        %v200 = vld [vmem:[%s164 + $0x28] sm:$0xff]
        %v201 = vld [vmem:[%s164 + $0x30] sm:$0xff]
        %v202 = vld [vmem:[%s164 + $0x38] sm:$0xff]
        %v203 = vld [vmem:[%s164 + $0x40] sm:$0xff]
        %v204 = vld [vmem:[%s164 + $0x48] sm:$0xff]
        %v205 = vld [vmem:[%s164 + $0x50] sm:$0xff]
        %v206 = vld [vmem:[%s164 + $0x58] sm:$0xff]
        %v207 = vld [vmem:[%s164 + $0x60] sm:$0xff]
        %v208 = vld [vmem:[%s164 + $0x68] sm:$0xff]
        %v209 = vld [vmem:[%s164 + $0x70] sm:$0xff]
        %v210 = vld [vmem:[%s164 + $0x78] sm:$0xff]
        %v211 = vld [vmem:[%s164 + $0x80] sm:$0xff]
        %v212 = vld [vmem:[%s164 + $0x88] sm:$0xff]
        %v213 = vld [vmem:[%s164 + $0x90] sm:$0xff]
        %v214 = vld [vmem:[%s164 + $0x98] sm:$0xff]
        %v215 = vld [vmem:[%s164 + $0xa0] sm:$0xff]
        %v216 = vld [vmem:[%s164 + $0xa8] sm:$0xff]
        %v217 = vld [vmem:[%s164 + $0xb0] sm:$0xff]
        %v218 = vld [vmem:[%s164 + $0xb8] sm:$0xff]
        %v219 = vld [vmem:[%s164 + $0xc0] sm:$0xff]
        %v220 = vld [vmem:[%s164 + $0xc8] sm:$0xff]
        %v221 = vld [vmem:[%s164 + $0xd0] sm:$0xff]
        %v222 = vld [vmem:[%s164 + $0xd8] sm:$0xff]
        %v223 = vld [vmem:[%s164 + $0xe0] sm:$0xff]
        %v224 = vld [vmem:[%s164 + $0xe8] sm:$0xff]
        %v225 = vld [vmem:[%s164 + $0xf0] sm:$0xff]
        %v226 = vld [vmem:[%s164 + $0xf8] sm:$0xff]
        %v227 = vld [vmem:[%s164 + $0x100] sm:$0xff]
        %v228 = vld [vmem:[%s164 + $0x108] sm:$0xff]
        %v229 = vld [vmem:[%s164 + $0x110] sm:$0xff]
        %v230 = vld [vmem:[%s164 + $0x118] sm:$0xff]
        %v231 = vld [vmem:[%s164 + $0x120] sm:$0xff]
        %v232 = vld [vmem:[%s164 + $0x128] sm:$0xff]
        %v233 = vld [vmem:[%s164 + $0x130] sm:$0xff]
        %v234 = vld [vmem:[%s164 + $0x138] sm:$0xff]
        %v235 = vld [vmem:[%s164 + $0x140] sm:$0xff]
        %v236 = vld [vmem:[%s164 + $0x148] sm:$0xff]
        %v237 = vld [vmem:[%s164 + $0x150] sm:$0xff]
        %v238 = vld [vmem:[%s164 + $0x158] sm:$0xff]
        %v239 = vld [vmem:[%s164 + $0x160] sm:$0xff]
        %v240 = vld [vmem:[%s164 + $0x168] sm:$0xff]
        %v241 = vld [vmem:[%s164 + $0x170] sm:$0xff]
        %v242 = vld [vmem:[%s164 + $0x178] sm:$0xff]
        %v243 = vld [vmem:[%s164 + $0x180] sm:$0xff]
        %v244 = vld [vmem:[%s164 + $0x188] sm:$0xff]
        %v245 = vld [vmem:[%s164 + $0x190] sm:$0xff]
        %v246 = vld [vmem:[%s164 + $0x198] sm:$0xff]
        %v247 = vld [vmem:[%s164 + $0x1a0] sm:$0xff]
        %v248 = vld [vmem:[%s164 + $0x1a8] sm:$0xff]
        %v249 = vld [vmem:[%s164 + $0x1b0] sm:$0xff]
        %v250 = vld [vmem:[%s164 + $0x1b8] sm:$0xff]
        %v251 = vld [vmem:[%s164 + $0x1c0] sm:$0xff]
        %v252 = vld [vmem:[%s164 + $0x1c8] sm:$0xff]
        %v253 = vld [vmem:[%s164 + $0x1d0] sm:$0xff]
        %v254 = vld [vmem:[%s164 + $0x1d8] sm:$0xff]
        %v255 = vld [vmem:[%s164 + $0x1e0] sm:$0xff]
        %v256 = vld [vmem:[%s164 + $0x1e8] sm:$0xff]
        %v257 = vld [vmem:[%s164 + $0x1f0] sm:$0xff]
        %v258 = vld [vmem:[%s164 + $0x1f8] sm:$0xff]
        %v259 = vld [vmem:[%s181] sm:$0x1]
        %v260 = vadd.f32 %v195, %v196
        %v261 = vadd.f32 %v260, %v197
        %v262 = vadd.f32 %v261, %v198
        %v263 = vadd.f32 %v262, %v199
        %v264 = vadd.f32 %v263, %v200
        %v265 = vadd.f32 %v264, %v201
        %v266 = vadd.f32 %v265, %v202
        %v267 = vadd.f32 %v266, %v203
        %v268 = vadd.f32 %v267, %v204
        %v269 = vadd.f32 %v268, %v205
        %v270 = vadd.f32 %v269, %v206
        %v271 = vadd.f32 %v270, %v207
        %v272 = vadd.f32 %v271, %v208
        %v273 = vadd.f32 %v272, %v209
        %v274 = vadd.f32 %v273, %v210
        %v275 = vadd.f32 %v274, %v211
        %v276 = vadd.f32 %v275, %v212
        %v277 = vadd.f32 %v276, %v213
        %v278 = vadd.f32 %v277, %v214
        %v279 = vadd.f32 %v278, %v215
        %v280 = vadd.f32 %v279, %v216
        %v281 = vadd.f32 %v280, %v217
        %v282 = vadd.f32 %v281, %v218
        %v283 = vadd.f32 %v282, %v219
        %v284 = vadd.f32 %v283, %v220
        %v285 = vadd.f32 %v284, %v221
        %v286 = vadd.f32 %v285, %v222
        %v287 = vadd.f32 %v286, %v223
        %v288 = vadd.f32 %v287, %v224
        %v289 = vadd.f32 %v288, %v225
        %v290 = vadd.f32 %v289, %v226
        %v291 = vadd.f32 %v290, %v227
        %v292 = vadd.f32 %v291, %v228
        %v293 = vadd.f32 %v292, %v229
        %v294 = vadd.f32 %v293, %v230
        %v295 = vadd.f32 %v294, %v231
        %v296 = vadd.f32 %v295, %v232
        %v297 = vadd.f32 %v296, %v233
        %v298 = vadd.f32 %v297, %v234
        %v299 = vadd.f32 %v298, %v235
        %v300 = vadd.f32 %v299, %v236
        %v301 = vadd.f32 %v300, %v237
        %v302 = vadd.f32 %v301, %v238
        %v303 = vadd.f32 %v302, %v239
        %v304 = vadd.f32 %v303, %v240
        %v305 = vadd.f32 %v304, %v241
        %v306 = vadd.f32 %v305, %v242
        %v307 = vadd.f32 %v306, %v243
        %v308 = vadd.f32 %v307, %v244
        %v309 = vadd.f32 %v308, %v245
        %v310 = vadd.f32 %v309, %v246
        %v311 = vadd.f32 %v310, %v247
        %v312 = vadd.f32 %v311, %v248
        %v313 = vadd.f32 %v312, %v249
        %v314 = vadd.f32 %v313, %v250
        %v315 = vadd.f32 %v314, %v251
        %v316 = vadd.f32 %v315, %v252
        %v317 = vadd.f32 %v316, %v253
        %v318 = vadd.f32 %v317, %v254
        %v319 = vadd.f32 %v318, %v255
        %v320 = vadd.f32 %v319, %v256
        %v321 = vadd.f32 %v320, %v257
        %v322 = vadd.f32 %v321, %v258
        %v323 = vrot.slane %v322, 4
        %v324 = vadd.f32 %v322, %v323
        %v325 = vrot.slane %v324, 2
        %v326 = vadd.f32 %v324, %v325
        %v327 = vrot.slane %v326, 1
        %v328 = vadd.f32 %v326, %v327
        %v329 = vadd.f32 %v259, %v328
        %330 = vst [vmem:[%s181] sm:$0x1] %v329
        %v331 = vld [vmem:[%s187] sm:$0x1]
        %v332 = vmul.f32 %v195, %v195
        %v333 = vmul.f32 %v196, %v196
        %v334 = vmul.f32 %v197, %v197
        %v335 = vmul.f32 %v198, %v198
        %v336 = vmul.f32 %v199, %v199
        %v337 = vmul.f32 %v200, %v200
        %v338 = vmul.f32 %v201, %v201
        %v339 = vmul.f32 %v202, %v202
        %v340 = vmul.f32 %v203, %v203
        %v341 = vmul.f32 %v204, %v204
        %v342 = vmul.f32 %v205, %v205
        %v343 = vmul.f32 %v206, %v206
        %v344 = vmul.f32 %v207, %v207
        %v345 = vmul.f32 %v208, %v208
        %v346 = vmul.f32 %v209, %v209
        %v347 = vmul.f32 %v210, %v210
        %v348 = vmul.f32 %v211, %v211
        %v349 = vmul.f32 %v212, %v212
        %v350 = vmul.f32 %v213, %v213
        %v351 = vmul.f32 %v214, %v214
        %v352 = vmul.f32 %v215, %v215
        %v353 = vmul.f32 %v216, %v216
        %v354 = vmul.f32 %v217, %v217
        %v355 = vmul.f32 %v218, %v218
        %v356 = vmul.f32 %v219, %v219
        %v357 = vmul.f32 %v220, %v220
        %v358 = vmul.f32 %v221, %v221
        %v359 = vmul.f32 %v222, %v222
        %v360 = vmul.f32 %v223, %v223
        %v361 = vmul.f32 %v224, %v224
        %v362 = vmul.f32 %v225, %v225
        %v363 = vmul.f32 %v226, %v226
        %v364 = vmul.f32 %v227, %v227
        %v365 = vmul.f32 %v228, %v228
        %v366 = vmul.f32 %v229, %v229
        %v367 = vmul.f32 %v230, %v230
        %v368 = vmul.f32 %v231, %v231
        %v369 = vmul.f32 %v232, %v232
        %v370 = vmul.f32 %v233, %v233
        %v371 = vmul.f32 %v234, %v234
        %v372 = vmul.f32 %v235, %v235
        %v373 = vmul.f32 %v236, %v236
        %v374 = vmul.f32 %v237, %v237
        %v375 = vmul.f32 %v238, %v238
        %v376 = vmul.f32 %v239, %v239
        %v377 = vmul.f32 %v240, %v240
        %v378 = vmul.f32 %v241, %v241
        %v379 = vmul.f32 %v242, %v242
        %v380 = vmul.f32 %v243, %v243
        %v381 = vmul.f32 %v244, %v244
        %v382 = vmul.f32 %v245, %v245
        %v383 = vmul.f32 %v246, %v246
        %v384 = vmul.f32 %v247, %v247
        %v385 = vmul.f32 %v248, %v248
        %v386 = vmul.f32 %v249, %v249
        %v387 = vmul.f32 %v250, %v250
        %v388 = vmul.f32 %v251, %v251
        %v389 = vmul.f32 %v252, %v252
        %v390 = vmul.f32 %v253, %v253
        %v391 = vmul.f32 %v254, %v254
        %v392 = vmul.f32 %v255, %v255
        %v393 = vmul.f32 %v256, %v256
        %v394 = vmul.f32 %v257, %v257
        %v395 = vmul.f32 %v258, %v258
        %v396 = vadd.f32 %v332, %v333
        %v397 = vadd.f32 %v396, %v334
        %v398 = vadd.f32 %v397, %v335
        %v399 = vadd.f32 %v398, %v336
        %v400 = vadd.f32 %v399, %v337
        %v401 = vadd.f32 %v400, %v338
        %v402 = vadd.f32 %v401, %v339
        %v403 = vadd.f32 %v402, %v340
        %v404 = vadd.f32 %v403, %v341
        %v405 = vadd.f32 %v404, %v342
        %v406 = vadd.f32 %v405, %v343
        %v407 = vadd.f32 %v406, %v344
        %v408 = vadd.f32 %v407, %v345
        %v409 = vadd.f32 %v408, %v346
        %v410 = vadd.f32 %v409, %v347
        %v411 = vadd.f32 %v410, %v348
        %v412 = vadd.f32 %v411, %v349
        %v413 = vadd.f32 %v412, %v350
        %v414 = vadd.f32 %v413, %v351
        %v415 = vadd.f32 %v414, %v352
        %v416 = vadd.f32 %v415, %v353
        %v417 = vadd.f32 %v416, %v354
        %v418 = vadd.f32 %v417, %v355
        %v419 = vadd.f32 %v418, %v356
        %v420 = vadd.f32 %v419, %v357
        %v421 = vadd.f32 %v420, %v358
        %v422 = vadd.f32 %v421, %v359
        %v423 = vadd.f32 %v422, %v360
        %v424 = vadd.f32 %v423, %v361
        %v425 = vadd.f32 %v424, %v362
        %v426 = vadd.f32 %v425, %v363
        %v427 = vadd.f32 %v426, %v364
        %v428 = vadd.f32 %v427, %v365
        %v429 = vadd.f32 %v428, %v366
        %v430 = vadd.f32 %v429, %v367
        %v431 = vadd.f32 %v430, %v368
        %v432 = vadd.f32 %v431, %v369
        %v433 = vadd.f32 %v432, %v370
        %v434 = vadd.f32 %v433, %v371
        %v435 = vadd.f32 %v434, %v372
        %v436 = vadd.f32 %v435, %v373
        %v437 = vadd.f32 %v436, %v374
        %v438 = vadd.f32 %v437, %v375
        %v439 = vadd.f32 %v438, %v376
        %v440 = vadd.f32 %v439, %v377
        %v441 = vadd.f32 %v440, %v378
        %v442 = vadd.f32 %v441, %v379
        %v443 = vadd.f32 %v442, %v380
        %v444 = vadd.f32 %v443, %v381
        %v445 = vadd.f32 %v444, %v382
        %v446 = vadd.f32 %v445, %v383
        %v447 = vadd.f32 %v446, %v384
        %v448 = vadd.f32 %v447, %v385
        %v449 = vadd.f32 %v448, %v386
        %v450 = vadd.f32 %v449, %v387
        %v451 = vadd.f32 %v450, %v388
        %v452 = vadd.f32 %v451, %v389
        %v453 = vadd.f32 %v452, %v390
        %v454 = vadd.f32 %v453, %v391
        %v455 = vadd.f32 %v454, %v392
        %v456 = vadd.f32 %v455, %v393
        %v457 = vadd.f32 %v456, %v394
        %v458 = vadd.f32 %v457, %v395
        %v459 = vrot.slane %v458, 4
        %v460 = vadd.f32 %v458, %v459
        %v461 = vrot.slane %v460, 2
        %v462 = vadd.f32 %v460, %v461
        %v463 = vrot.slane %v462, 1
        %v464 = vadd.f32 %v462, %v463
        %v465 = vadd.f32 %v331, %v464
        %466 = vst [vmem:[%s187] sm:$0x1] %v465
        %s467 = sand.u32 %s71, 1
        %s468 = scalar_lea.sflag [#allocation4], %s467
        %s469 = sand.u32 %s71, 1
        %s470 = scalar_lea.vmem [#allocation5], %s469
        %s471 = sand.u32 %s97, 1
        %s472 = scalar_lea.sflag [#allocation7], %s471
        %s473 = sand.u32 %s97, 1
        %s474 = scalar_lea.vmem [#allocation6], %s473
        // Predicated region
        $region33: #{tpu_custom_call.1} parent=23 // pred_check
          %p475 = pneg %p81
        $region34: #{tpu_custom_call.1} parent=23 // pred_check_branch
          %477 = sbr.rel (%p475) target = $region36
        $region35: #{tpu_custom_call.1} parent=23 // pred_region
          %s479 = ssub.s32 16, 16
          %480 = vsyncadd %s468, %s479
          %s481 = smul.addr %s27, 16
          %s482 = scalar_lea.hbm %s1, %s481
          %s484 = sshll.u32 %s470, 4
          %s485 = int_to_ptr.vmem [resolvable:$true] %s484
          %487 = dma.vmem_to_hbm [thread:$0]  %s485, 16, %s482, %s468
        $region36: #{tpu_custom_call.1} parent=23 // pred_fallthru
          _
        // Predicated region
        $region37: #{tpu_custom_call.1} parent=23 // pred_check
          %p488 = pneg %p107
        $region38: #{tpu_custom_call.1} parent=23 // pred_check_branch
          %490 = sbr.rel (%p488) target = $region40
        $region39: #{tpu_custom_call.1} parent=23 // pred_region
          %s492 = ssub.s32 16, 16
          %493 = vsyncadd %s472, %s492
          %s494 = smul.addr %s27, 16
          %s495 = scalar_lea.hbm %s2, %s494
          %s497 = sshll.u32 %s474, 4
          %s498 = int_to_ptr.vmem [resolvable:$true] %s497
          %500 = dma.vmem_to_hbm [thread:$0]  %s498, 16, %s495, %s472
        $region40: #{tpu_custom_call.1} parent=23 // pred_fallthru
          _
      $region24: #{tpu_custom_call.1} parent=5 // pred_fallthru
        _
      %p501 = scmp.le.s32.totalorder 2, %s18
      // Predicated region
      $region41: #{tpu_custom_call.1} parent=5 // pred_check
        %p502 = pneg %p501
      $region42: #{tpu_custom_call.1} parent=5 // pred_check_branch
        %504 = sbr.rel (%p502) target = $region44
      $region43: #{tpu_custom_call.1} parent=5 // pred_region
        %s505 = ssub.s32 %s18, 2
        // Predicated region
        $region45: #{tpu_custom_call.1} parent=43 // pred_check
          %p506 = pneg %p87
        $region46: #{tpu_custom_call.1} parent=43 // pred_check_branch
          %508 = sbr.rel (%p506) target = $region48
        $region47: #{tpu_custom_call.1} parent=43 // pred_region
          %s509 = sand.u32 %s72, 1
          %s510 = scalar_lea.sflag [#allocation4], %s509
          %s511 = sand.u32 %s72, 1
          %s512 = scalar_lea.vmem [#allocation5], %s511
          %513 = dma.done %s510, 16
        $region48: #{tpu_custom_call.1} parent=43 // pred_fallthru
          _
        // Predicated region
        $region49: #{tpu_custom_call.1} parent=43 // pred_check
          %p514 = pneg %p113
        $region50: #{tpu_custom_call.1} parent=43 // pred_check_branch
          %516 = sbr.rel (%p514) target = $region52
        $region51: #{tpu_custom_call.1} parent=43 // pred_region
          %s517 = sand.u32 %s98, 1
          %s518 = scalar_lea.sflag [#allocation7], %s517
          %s519 = sand.u32 %s98, 1
          %s520 = scalar_lea.vmem [#allocation6], %s519
          %521 = dma.done %s518, 16
        $region52: #{tpu_custom_call.1} parent=43 // pred_fallthru
          _
      $region44: #{tpu_custom_call.1} parent=5 // pred_fallthru
        _
    $region6: #{tpu_custom_call.1} parent=1 // loop_footer
      %s22 = sadd.s32 1, %s18
    $region7: #{tpu_custom_call.1} parent=1 // loop_footer_branch
      %17 = sbr.rel target = $region3
    $region8: #{tpu_custom_call.1} parent=1 // loop_exit
      _
    %522 = vsyncpa [#allocation3], 1
    %s523 = scalar_lea.sflag [#allocation3], 1
    %524 = vsyncpa %s523, 1
    %525 = vsyncpa [#allocation4], 1
    %s526 = scalar_lea.sflag [#allocation4], 1
    %527 = vsyncpa %s526, 1
    %528 = vsyncpa [#allocation7], 1
    %s529 = scalar_lea.sflag [#allocation7], 1
    %530 = vsyncpa %s529, 1

</llo_original>
